<compile_context>
chip_gen: v7x
topology: tpu7x:2x2x1
jax: 0.10.0
libtpu: 0.0.40
codegen_flags: <defaults>
</compile_context>

<pallas_src>
import functools
import math

import jax
import jax.numpy as jnp
from jax.experimental import pallas as pl
from jax.experimental.pallas import tpu as pltpu


def _round_up(x, m):
    return -(-x // m) * m


def _one_hot_kernel(lbl_ref, rep_ref, cls_ref, out_ref, *, compute_dtype,
                    precision):
    # lbl_ref: (T, G) int32        -- per-tile labels
    # rep_ref: (G, W) compute_dtype -- constant, resident: rep[g, l] = (l//C == g)
    # cls_ref: (1, W) float32       -- constant, resident: cls[l] = l % C
    # out_ref: (T, W) float32       -- lane-dense (W % 128 == 0)
    lbl = lbl_ref[...].astype(compute_dtype)                       # (T, G)
    # lbl_rep[r, l] = labels[r, l // C]; exactly one nonzero term per lane,
    # f32 accumulation -> exact integer values.
    lbl_rep = jnp.dot(lbl, rep_ref[...],
                      preferred_element_type=jnp.float32,
                      precision=precision)                         # (T, W)
    # Exact-integer equality; cls row broadcasts along sublanes.
    out_ref[...] = (lbl_rep == cls_ref[...]).astype(jnp.float32)


@functools.partial(jax.jit, static_argnames=("num_classes", "tile_rows"))
def one_hot(labels, num_classes=10, *, tile_rows=None):
    """Pallas TPU one-hot: int labels (any shape) -> float32 [..., num_classes]."""
    labels = jnp.asarray(labels)
    orig_shape = labels.shape
    c = int(num_classes)
    n = int(math.prod(orig_shape)) if orig_shape else 1

    # Smallest group size G so the output lane width W = G*C is a multiple of
    # 128 (full-width stores / dense writeback DMA).
    g = 128 // math.gcd(c, 128)
    w = g * c

    # MXU operand dtype: single-pass bf16 is exact while labels/classes < 256;
    # otherwise f32 operands with 3-pass (bf16x3) accumulation (exact < 2^24).
    if c <= 256:
        compute_dtype, precision, cst_bytes = jnp.bfloat16, None, 2
    else:
        compute_dtype, precision, cst_bytes = (
            jnp.float32, jax.lax.Precision.HIGH, 4)

    rows = -(-n // g)  # ceil(n / g)

    # Tile rows from a VMEM byte budget (double-buffered f32 out + i32 in),
    # so the pipeline fits scoped VMEM on v5e/v6e and v7x for any num_classes.
    budget = 12 << 20
    bytes_per_row = 2 * 4 * (w + g)
    tr_budget = max(8, (budget // bytes_per_row) // 8 * 8)
    if tile_rows is not None:
        tr_budget = max(8, min(tr_budget, (int(tile_rows) // 8) * 8 or 8))

    if rows <= tr_budget:
        if rows >= 16:
            # Two parallel grid steps so v7x's 2 TensorCores both get work.
            tr = _round_up(-(-rows // 2), 8)
            rows_pad = 2 * tr
        else:
            tr = rows_pad = rows          # single full-array block
    else:
        tr = tr_budget
        rows_pad = _round_up(rows, tr)
    n_pad = rows_pad * g

    flat = labels.reshape(-1).astype(jnp.int32)
    if n_pad > n:
        # -1 never matches any class -> padded rows are all zeros (trimmed).
        flat = jnp.pad(flat, (0, n_pad - n), constant_values=-1)
    labels_2d = flat.reshape(rows_pad, g)

    # Grid-invariant constants, hoisted out of the kernel body.
    lane = jnp.arange(w, dtype=jnp.int32)
    rep = (lane[None, :] // c == jnp.arange(g, dtype=jnp.int32)[:, None]
           ).astype(compute_dtype)                       # (G, W)
    cls_row = (lane % c).astype(jnp.float32)[None, :]    # (1, W)

    kernel = functools.partial(_one_hot_kernel,
                               compute_dtype=compute_dtype,
                               precision=precision)

    pipe_bytes = 2 * tr * (w + g) * 4 + 2 * (g * w * cst_bytes + w * 4)
    vmem_limit = int(min(max(pipe_bytes + (4 << 20), 32 << 20), 100 << 20))

    cost = pl.CostEstimate(
        flops=int(2 * rows_pad * g * w),
        transcendentals=0,
        bytes_accessed=int(rows_pad * (g + w) * 4 + g * w * cst_bytes + w * 4),
    )

    out2d = pl.pallas_call(
        kernel,
        out_shape=jax.ShapeDtypeStruct((rows_pad, w), jnp.float32),
        grid=(rows_pad // tr,),
        in_specs=[
            pl.BlockSpec((tr, g), lambda i: (i, 0)),
            pl.BlockSpec((g, w), lambda i: (0, 0)),   # resident constant
            pl.BlockSpec((1, w), lambda i: (0, 0)),   # resident constant
        ],
        out_specs=pl.BlockSpec((tr, w), lambda i: (i, 0)),
        compiler_params=pltpu.CompilerParams(
            dimension_semantics=("parallel",),
            vmem_limit_bytes=vmem_limit,
        ),
        cost_estimate=cost,
    )(labels_2d, rep, cls_row)

    # (rows_pad, G*C) row-major == padded (N_pad, C) row-major.
    if n_pad == n:
        return out2d.reshape(orig_shape + (c,))
    # TODO(synk): a ragged tail still costs one extra HBM copy for this trim;
    # a tail-only second kernel writing into the final buffer would avoid it.
    return out2d.reshape(-1)[: n * c].reshape(orig_shape + (c,))


if __name__ == "__main__":
    num_classes = 10
    key = jax.random.PRNGKey(0)
    k1, k2 = jax.random.split(key)

    # Small label tensor matching the module usage: batch=2, seq=8.
    labels = jax.random.randint(k1, (2, 8), 0, num_classes, dtype=jnp.int32)
    out = jax.block_until_ready(one_hot(labels, num_classes=num_classes))
    ref = jax.nn.one_hot(labels, num_classes, dtype=jnp.float32)
    assert out.shape == (2, 8, num_classes)
    assert out.dtype == jnp.float32
    assert bool(jnp.all(out == ref))

    # Multi-tile grid + ragged-tail padding path.
    labels2 = jax.random.randint(k2, (64, 100), 0, num_classes, dtype=jnp.int32)
    out2 = jax.block_until_ready(
        one_hot(labels2, num_classes=num_classes, tile_rows=32))
    ref2 = jax.nn.one_hot(labels2, num_classes, dtype=jnp.float32)
    assert out2.shape == (64, 100, num_classes)
    assert bool(jnp.all(out2 == ref2))

    # No-padding fast path (trim skipped) + budget-derived 2-step grid.
    labels3 = jax.random.randint(k1, (128, 64), 0, num_classes, dtype=jnp.int32)
    out3 = jax.block_until_ready(one_hot(labels3, num_classes=num_classes))
    ref3 = jax.nn.one_hot(labels3, num_classes, dtype=jnp.float32)
    assert bool(jnp.all(out3 == ref3))

    # num_classes > 256 path (f32 operands, Precision.HIGH).
    big_c = 300
    labels4 = jax.random.randint(k2, (4, 7), 0, big_c, dtype=jnp.int32)
    out4 = jax.block_until_ready(one_hot(labels4, num_classes=big_c))
    ref4 = jax.nn.one_hot(labels4, big_c, dtype=jnp.float32)
    assert bool(jnp.all(out4 == ref4))

    print("KERNEL_OK")
</pallas_src>

<mosaic_0001>
module attributes {stable_mosaic.version = 11 : i64} {
  func.func @_one_hot_kernel(%arg0: i32, %arg1: memref<1x64xi32, #tpu.memory_space<vmem>>, %arg2: memref<64x640xbf16, #tpu.memory_space<vmem>>, %arg3: memref<1x640xf32, #tpu.memory_space<vmem>>, %arg4: memref<1x640xf32, #tpu.memory_space<vmem>>) attributes {dimension_semantics = [#tpu.dimension_semantics<parallel>], iteration_bounds = array<i64: 1>, scalar_prefetch = 0 : i64, scratch_operands = 0 : i64, tpu.core_type = #tpu.core_type<tc>, window_params = [{transform_indices = @transform_0, window_bounds = array<i64: 1, 64>}, {pipeline_mode = #tpu.pipeline_mode<synchronous>, transform_indices = @transform_1, window_bounds = array<i64: 64, 640>}, {pipeline_mode = #tpu.pipeline_mode<synchronous>, transform_indices = @transform_2, window_bounds = array<i64: 1, 640>}, {transform_indices = @transform_3, window_bounds = array<i64: 1, 640>}]} {
    %c0 = arith.constant 0 : index
    %c0_0 = arith.constant 0 : index
    %0 = vector.load %arg1[%c0, %c0_0] : memref<1x64xi32, #tpu.memory_space<vmem>>, vector<1x64xi32>
    %1 = arith.sitofp %0 : vector<1x64xi32> to vector<1x64xbf16>
    %c0_1 = arith.constant 0 : index
    %c0_2 = arith.constant 0 : index
    %2 = vector.load %arg2[%c0_1, %c0_2] : memref<64x640xbf16, #tpu.memory_space<vmem>>, vector<64x640xbf16>
    %cst = arith.constant dense<0.000000e+00> : vector<1x640xf32>
    %3 = tpu.matmul %1, %2, %cst {dimension_numbers = #tpu.dot_dimension_numbers<[1], [0], [0], [1], [0, 0, 1, 1], [], []>} : vector<1x64xbf16>, vector<64x640xbf16>, vector<1x640xf32> -> vector<1x640xf32>
    %c0_3 = arith.constant 0 : index
    %c0_4 = arith.constant 0 : index
    %4 = vector.load %arg3[%c0_3, %c0_4] : memref<1x640xf32, #tpu.memory_space<vmem>>, vector<1x640xf32>
    %5 = arith.cmpf oeq, %3, %4 : vector<1x640xf32>
    %6 = arith.extui %5 : vector<1x640xi1> to vector<1x640xi32>
    %7 = arith.sitofp %6 : vector<1x640xi32> to vector<1x640xf32>
    %c0_5 = arith.constant 0 : index
    %c0_6 = arith.constant 0 : index
    %8 = vector.load %arg4[%c0_5, %c0_6] : memref<1x640xf32, #tpu.memory_space<vmem>>, vector<1x640xf32>
    tpu.vector_store %arg4[%c0_5, %c0_6], %7 {strides = array<i32>} : memref<1x640xf32, #tpu.memory_space<vmem>>, vector<1x640xf32>,
    return
  }
  func.func @transform_0(%arg0: i32) -> (i32, i32) {
    %c0_i32 = arith.constant 0 : i32
    %c0_i32_0 = arith.constant 0 : i32
    return %arg0, %c0_i32 : i32, i32
  }
  func.func @transform_1(%arg0: i32) -> (i32, i32) {
    %c0_i32 = arith.constant 0 : i32
    %c0_i32_0 = arith.constant 0 : i32
    %c0_i32_1 = arith.constant 0 : i32
    return %c0_i32, %c0_i32_0 : i32, i32
  }
  func.func @transform_2(%arg0: i32) -> (i32, i32) {
    %c0_i32 = arith.constant 0 : i32
    %c0_i32_0 = arith.constant 0 : i32
    %c0_i32_1 = arith.constant 0 : i32
    return %c0_i32, %c0_i32_0 : i32, i32
  }
  func.func @transform_3(%arg0: i32) -> (i32, i32) {
    %c0_i32 = arith.constant 0 : i32
    %c0_i32_0 = arith.constant 0 : i32
    return %arg0, %c0_i32 : i32, i32
  }
}

</mosaic_0001>

<llo_original>
// kernel: one_hot.1
$region0: #{one_hot.1}
  #allocation0 [shape = 'u32[]', space=smem, size = 0x4, offset = 0x4, fixed_abs, tag = 'smem constant byte address 0x4 - core index']
  #allocation1 [shape = 'u32[144,128]{1,0:T(1,128)}', space=vmem, size = 0x12000, scoped, tag = 'internal scratch']
  %s0 = inlined_call_operand.vmem [shape: s32[1,64], index: 0, kind: input, shape index: {}]
  %s1 = inlined_call_operand.vmem [shape: bf16[64,640], index: 1, kind: input, shape index: {}]
  %s2 = inlined_call_operand.vmem [shape: f32[1,640], index: 2, kind: input, shape index: {}]
  %s3 = inlined_call_operand.vmem [shape: f32[1,640], index: 3, kind: output, shape index: {}]
  %s4 = sld [smem:[#allocation0]]
  $region22: #{one_hot.1} parent=0
    _
  %s6 = ssub.s32 1, %s4
  %s7 = scalar_select 0, %s6, %s4
  // Predicated region
  $region2: #{one_hot.1} parent=0 // pred_check
    _
  $region3: #{one_hot.1} parent=0 // pred_check_branch
    %9 = sbr.rel (0) target = $region5
  $region4: #{one_hot.1} parent=0 // pred_region
    _
  $region5: #{one_hot.1} parent=0 // pred_fallthru
    _
  // Predicated region
  $region6: #{one_hot.1} parent=0 // pred_check
    _
  $region7: #{one_hot.1} parent=0 // pred_check_branch
    %11 = sbr.rel (0) target = $region9
  $region8: #{one_hot.1} parent=0 // pred_region
    _
  $region9: #{one_hot.1} parent=0 // pred_fallthru
    _
  // Predicated region
  $region10: #{one_hot.1} parent=0 // pred_check
    _
  $region11: #{one_hot.1} parent=0 // pred_check_branch
    %13 = sbr.rel (0) target = $region13
  $region12: #{one_hot.1} parent=0 // pred_region
    _
  $region13: #{one_hot.1} parent=0 // pred_fallthru
    _
  %v15 = vld [vmem:[%s0] sm:$0x1]
  %v16 = vcvt.s32.f32 %v15
  %v17 = vpack.c.bf16 %v16, %v16
  %v18 = vld [vmem:[%s1] sm:$0xff]
  %v19 = vld [vmem:[%s1 + $0x8] sm:$0xff]
  %v20 = vld [vmem:[%s1 + $0x10] sm:$0xf]
  %v21 = vld [vmem:[%s1 + $0x14] sm:$0xff]
  %v22 = vld [vmem:[%s1 + $0x1c] sm:$0xff]
  %v23 = vld [vmem:[%s1 + $0x24] sm:$0xf]
  %v24 = vld [vmem:[%s1 + $0x28] sm:$0xff]
  %v25 = vld [vmem:[%s1 + $0x30] sm:$0xff]
  %v26 = vld [vmem:[%s1 + $0x38] sm:$0xf]
  %v27 = vld [vmem:[%s1 + $0x3c] sm:$0xff]
  %v28 = vld [vmem:[%s1 + $0x44] sm:$0xff]
  %v29 = vld [vmem:[%s1 + $0x4c] sm:$0xf]
  %v30 = vld [vmem:[%s1 + $0x50] sm:$0xff]
  %v31 = vld [vmem:[%s1 + $0x58] sm:$0xff]
  %v32 = vld [vmem:[%s1 + $0x60] sm:$0xf]
  %v33 = vld [vmem:[%s1 + $0x64] sm:$0xff]
  %v34 = vld [vmem:[%s1 + $0x6c] sm:$0xff]
  %v35 = vld [vmem:[%s1 + $0x74] sm:$0xf]
  %v36 = vld [vmem:[%s1 + $0x78] sm:$0xff]
  %v37 = vld [vmem:[%s1 + $0x80] sm:$0xff]
  %v38 = vld [vmem:[%s1 + $0x88] sm:$0xf]
  %v39 = vld [vmem:[%s1 + $0x8c] sm:$0xff]
  %v40 = vld [vmem:[%s1 + $0x94] sm:$0xff]
  %v41 = vld [vmem:[%s1 + $0x9c] sm:$0xf]
  %v66 = vunpack.c.l.b16 %v18
  %v67 = vunpack.c.h.b16 %v18
  %v68 = vunpack.c.l.b16 %v19
  %v69 = vunpack.c.h.b16 %v19
  %v70 = vunpack.c.l.b16 %v20
  %v71 = vunpack.c.l.b16 %v21
  %v72 = vunpack.c.h.b16 %v21
  %v73 = vunpack.c.l.b16 %v22
  %v74 = vunpack.c.h.b16 %v22
  %v75 = vunpack.c.l.b16 %v23
  %v76 = vunpack.c.l.b16 %v24
  %v77 = vunpack.c.h.b16 %v24
  %v78 = vunpack.c.l.b16 %v25
  %v79 = vunpack.c.h.b16 %v25
  %v80 = vunpack.c.l.b16 %v26
  %v81 = vunpack.c.l.b16 %v27
  %v82 = vunpack.c.h.b16 %v27
  %v83 = vunpack.c.l.b16 %v28
  %v84 = vunpack.c.h.b16 %v28
  %v85 = vunpack.c.l.b16 %v29
  %v86 = vunpack.c.l.b16 %v30
  %v87 = vunpack.c.h.b16 %v30
  %v88 = vunpack.c.l.b16 %v31
  %v89 = vunpack.c.h.b16 %v31
  %v90 = vunpack.c.l.b16 %v32
  %v91 = vunpack.c.l.b16 %v33
  %v92 = vunpack.c.h.b16 %v33
  %v93 = vunpack.c.l.b16 %v34
  %v94 = vunpack.c.h.b16 %v34
  %v95 = vunpack.c.l.b16 %v35
  %v96 = vunpack.c.l.b16 %v36
  %v97 = vunpack.c.h.b16 %v36
  %v98 = vunpack.c.l.b16 %v37
  %v99 = vunpack.c.h.b16 %v37
  %v100 = vunpack.c.l.b16 %v38
  %v101 = vunpack.c.l.b16 %v39
  %v102 = vunpack.c.h.b16 %v39
  %v103 = vunpack.c.l.b16 %v40
  %v104 = vunpack.c.h.b16 %v40
  %v105 = vunpack.c.l.b16 %v41
  %v106 = vpack.c.b16 %v71, %v66
  %v107 = vpack.c.b16 %v72, %v67
  %v108 = vpack.c.b16 %v73, %v68
  %v109 = vpack.c.b16 %v74, %v69
  %v110 = vpack.c.b16 %v75, %v70
  %v111 = vpack.c.b16 %v81, %v76
  %v112 = vpack.c.b16 %v82, %v77
  %v113 = vpack.c.b16 %v83, %v78
  %v114 = vpack.c.b16 %v84, %v79
  %v115 = vpack.c.b16 %v85, %v80
  %v116 = vpack.c.b16 %v91, %v86
  %v117 = vpack.c.b16 %v92, %v87
  %v118 = vpack.c.b16 %v93, %v88
  %v119 = vpack.c.b16 %v94, %v89
  %v120 = vpack.c.b16 %v95, %v90
  %v121 = vpack.c.b16 %v101, %v96
  %v122 = vpack.c.b16 %v102, %v97
  %v123 = vpack.c.b16 %v103, %v98
  %v124 = vpack.c.b16 %v104, %v99
  %v125 = vpack.c.b16 %v105, %v100
  %vm146 = vcmask 523264
  %v148 = vsel %vm146, %v17, 0
  %150 = vmatprep.subr.bf16.mxu0 %v107
  %151 = vmatpush1.bf16.msra.mxu0 %v106
  %152 = vmatprep.subr.bf16.mxu0 %v112
  %153 = vmatpush1.bf16.msra.mxu0 %v111
  %154 = vmatprep.subr.bf16.mxu0 %v117
  %155 = vmatpush1.bf16.msra.mxu0 %v116
  %156 = vmatprep.subr.bf16.mxu0 %v122
  %157 = vmatpush1.bf16.msra.mxu0 %v121
  %158 = vmatprep.subr.bf16.mxu0 0
  %159 = vmatpush1.bf16.msra.mxu0 0
  %160 = vmatprep.subr.bf16.mxu0 0
  %161 = vmatpush1.bf16.msra.mxu0 0
  %162 = vmatprep.subr.bf16.mxu0 0
  %163 = vmatpush1.bf16.msra.mxu0 0
  %164 = vmatprep.subr.bf16.mxu0 0
  %165 = vmatpush1.bf16.msra.mxu0 0
  %166 = vmatprep.subr.bf16.mxu0 0
  %167 = vmatpush1.bf16.msra.mxu0 0
  %168 = vmatprep.subr.bf16.mxu0 0
  %169 = vmatpush1.bf16.msra.mxu0 0
  %170 = vmatprep.subr.bf16.mxu0 0
  %171 = vmatpush1.bf16.msra.mxu0 0
  %172 = vmatprep.subr.bf16.mxu0 0
  %173 = vmatpush1.bf16.msra.mxu0 0
  %174 = vmatprep.subr.bf16.mxu0 0
  %175 = vmatpush1.bf16.msra.mxu0 0
  %176 = vmatprep.subr.bf16.mxu0 0
  %177 = vmatpush1.bf16.msra.mxu0 0
  %178 = vmatprep.subr.bf16.mxu0 0
  %179 = vmatpush1.bf16.msra.mxu0 0
  %180 = vmatprep.subr.bf16.mxu0 0
  %181 = vmatpush1.bf16.msra.mxu0 0
  %182 = vmatprep.mubr.bf16.mxu0 0
  %183 = vmatmul.mubr.bf16.gmra.mrb[0].mxu0 %v148
  %v184 = vpop.f32.mrb[0].mxu0
  %v185 = vadd.f32 0.0, %v184
  %v186 = vpop.f32.mrb[0].mxu0
  %v187 = vadd.f32 0.0, %v186
  %v188 = vpop.f32.mrb[0].mxu0
  %v189 = vpop.f32.mrb[0].mxu0
  %190 = vdwg.mxu0
  %191 = vmatprep.subr.bf16.mxu0 %v109
  %192 = vmatpush1.bf16.msra.mxu0 %v108
  %193 = vmatprep.subr.bf16.mxu0 %v114
  %194 = vmatpush1.bf16.msra.mxu0 %v113
  %195 = vmatprep.subr.bf16.mxu0 %v119
  %196 = vmatpush1.bf16.msra.mxu0 %v118
  %197 = vmatprep.subr.bf16.mxu0 %v124
  %198 = vmatpush1.bf16.msra.mxu0 %v123
  %199 = vmatprep.subr.bf16.mxu0 0
  %200 = vmatpush1.bf16.msra.mxu0 0
  %201 = vmatprep.subr.bf16.mxu0 0
  %202 = vmatpush1.bf16.msra.mxu0 0
  %203 = vmatprep.subr.bf16.mxu0 0
  %204 = vmatpush1.bf16.msra.mxu0 0
  %205 = vmatprep.subr.bf16.mxu0 0
  %206 = vmatpush1.bf16.msra.mxu0 0
  %207 = vmatprep.subr.bf16.mxu0 0
  %208 = vmatpush1.bf16.msra.mxu0 0
  %209 = vmatprep.subr.bf16.mxu0 0
  %210 = vmatpush1.bf16.msra.mxu0 0
  %211 = vmatprep.subr.bf16.mxu0 0
  %212 = vmatpush1.bf16.msra.mxu0 0
  %213 = vmatprep.subr.bf16.mxu0 0
  %214 = vmatpush1.bf16.msra.mxu0 0
  %215 = vmatprep.subr.bf16.mxu0 0
  %216 = vmatpush1.bf16.msra.mxu0 0
  %217 = vmatprep.subr.bf16.mxu0 0
  %218 = vmatpush1.bf16.msra.mxu0 0
  %219 = vmatprep.subr.bf16.mxu0 0
  %220 = vmatpush1.bf16.msra.mxu0 0
  %221 = vmatprep.subr.bf16.mxu0 0
  %222 = vmatpush1.bf16.msra.mxu0 0
  %223 = vmatprep.mubr.bf16.mxu0 0
  %224 = vmatmul.mubr.bf16.gmra.mrb[0].mxu0 %v148
  %v225 = vpop.f32.mrb[0].mxu0
  %v226 = vadd.f32 0.0, %v225
  %v227 = vpop.f32.mrb[0].mxu0
  %v228 = vadd.f32 0.0, %v227
  %v229 = vpop.f32.mrb[0].mxu0
  %v230 = vpop.f32.mrb[0].mxu0
  %231 = vdwg.mxu0
  %232 = vmatprep.subr.bf16.mxu0 0
  %233 = vmatpush1.bf16.msra.mxu0 %v110
  %234 = vmatprep.subr.bf16.mxu0 0
  %235 = vmatpush1.bf16.msra.mxu0 %v115
  %236 = vmatprep.subr.bf16.mxu0 0
  %237 = vmatpush1.bf16.msra.mxu0 %v120
  %238 = vmatprep.subr.bf16.mxu0 0
  %239 = vmatpush1.bf16.msra.mxu0 %v125
  %240 = vmatprep.subr.bf16.mxu0 0
  %241 = vmatpush1.bf16.msra.mxu0 0
  %242 = vmatprep.subr.bf16.mxu0 0
  %243 = vmatpush1.bf16.msra.mxu0 0
  %244 = vmatprep.subr.bf16.mxu0 0
  %245 = vmatpush1.bf16.msra.mxu0 0
  %246 = vmatprep.subr.bf16.mxu0 0
  %247 = vmatpush1.bf16.msra.mxu0 0
  %248 = vmatprep.subr.bf16.mxu0 0
  %249 = vmatpush1.bf16.msra.mxu0 0
  %250 = vmatprep.subr.bf16.mxu0 0
  %251 = vmatpush1.bf16.msra.mxu0 0
  %252 = vmatprep.subr.bf16.mxu0 0
  %253 = vmatpush1.bf16.msra.mxu0 0
  %254 = vmatprep.subr.bf16.mxu0 0
  %255 = vmatpush1.bf16.msra.mxu0 0
  %256 = vmatprep.subr.bf16.mxu0 0
  %257 = vmatpush1.bf16.msra.mxu0 0
  %258 = vmatprep.subr.bf16.mxu0 0
  %259 = vmatpush1.bf16.msra.mxu0 0
  %260 = vmatprep.subr.bf16.mxu0 0
  %261 = vmatpush1.bf16.msra.mxu0 0
  %262 = vmatprep.subr.bf16.mxu0 0
  %263 = vmatpush1.bf16.msra.mxu0 0
  %264 = vmatprep.mubr.bf16.mxu0 0
  %265 = vmatmul.mubr.bf16.gmra.mrb[0].mxu0 %v148
  %v266 = vpop.f32.mrb[0].mxu0
  %v267 = vadd.f32 0.0, %v266
  %v268 = vpop.f32.mrb[0].mxu0
  %v269 = vpop.f32.mrb[0].mxu0
  %v270 = vpop.f32.mrb[0].mxu0
  %271 = vdwg.mxu0
  %v272 = vld [vmem:[%s2] sm:$0x1f]
  %v274 = vlaneseq
  %v275 = vshrl.u32 %v274, 7
  %v276 = vsub.s32 0, %v275
  %v277 = vrot.slane %v272, %v276
  %v278 = vlaneseq
  %v279 = vshrl.u32 %v278, 7
  %v280 = vsub.s32 1, %v279
  %v281 = vrot.slane %v272, %v280
  %v282 = vlaneseq
  %v283 = vshrl.u32 %v282, 7
  %v284 = vsub.s32 2, %v283
  %v285 = vrot.slane %v272, %v284
  %v286 = vlaneseq
  %v287 = vshrl.u32 %v286, 7
  %v288 = vsub.s32 3, %v287
  %v289 = vrot.slane %v272, %v288
  %v290 = vlaneseq
  %v291 = vshrl.u32 %v290, 7
  %v292 = vsub.s32 4, %v291
  %v293 = vrot.slane %v272, %v292
  %vm299 = vcmp.eq.f32.partialorder %v185, %v277
  %vm300 = vcmp.eq.f32.partialorder %v187, %v281
  %vm301 = vcmp.eq.f32.partialorder %v226, %v285
  %vm302 = vcmp.eq.f32.partialorder %v228, %v289
  %vm303 = vcmp.eq.f32.partialorder %v267, %v293
  %v304 = vsel %vm299, 1, 0
  %v305 = vsel %vm300, 1, 0
  %v306 = vsel %vm301, 1, 0
  %v307 = vsel %vm302, 1, 0
  %v308 = vsel %vm303, 1, 0
  %v309 = vcvt.s32.f32 %v304
  %v310 = vcvt.s32.f32 %v305
  %v311 = vcvt.s32.f32 %v306
  %v312 = vcvt.s32.f32 %v307
  %v313 = vcvt.s32.f32 %v308
  %v319 = vcombine.low %v309, %v310
  %v320 = vcombine.low %v311, %v312
  %v322 = vunpack.c.l.s4 1966171168
  %v323 = vunpack.c.0.s8 %v322
  %v324 = vlaneseq
  %v325 = vshrl.u32 %v324, 7
  %v326 = vsub.s32 %v323, %v325
  %v327 = vrot.slane %v319, %v326
  %v329 = vunpack.c.l.s4 1966171168
  %v330 = vunpack.c.0.s8 %v329
  %v331 = vlaneseq
  %v332 = vshrl.u32 %v331, 7
  %v333 = vsub.s32 %v330, %v332
  %v334 = vrot.slane %v320, %v333
  %v336 = vunpack.c.l.s4 1966171168
  %v337 = vunpack.c.0.s8 %v336
  %v338 = vlaneseq
  %v339 = vshrl.u32 %v338, 7
  %v340 = vsub.s32 %v337, %v339
  %v341 = vrot.slane %v313, %v340
  %v342 = vcombine.low %v327, %v334
  %v344 = vunpack.c.l.s4 1966171168
  %v345 = vunpack.c.0.s8 %v344
  %v346 = vlaneseq
  %v347 = vshrl.u32 %v346, 7
  %v348 = vsub.s32 %v345, %v347
  %v349 = vrot.slane %v342, %v348
  %v351 = vunpack.c.l.s4 1966171168
  %v352 = vunpack.c.0.s8 %v351
  %v353 = vlaneseq
  %v354 = vshrl.u32 %v353, 7
  %v355 = vsub.s32 %v352, %v354
  %v356 = vrot.slane %v341, %v355
  %v357 = vcombine.low %v349, %v356
  %v359 = vlaneseq
  %vm360 = vcmp.ge.s32.totalorder %v359, 0
  %vm361 = vcmp.lt.s32.totalorder %v359, 640
  %vm362 = vmand %vm360, %vm361
  %363 = vst.msk [vmem:[%s3] sm:$0x1f] %vm362, %v357
  // Predicated region
  $region14: #{one_hot.1} parent=0 // pred_check
    _
  $region15: #{one_hot.1} parent=0 // pred_check_branch
    %365 = sbr.rel (0) target = $region17
  $region16: #{one_hot.1} parent=0 // pred_region
    _
  $region17: #{one_hot.1} parent=0 // pred_fallthru
    _
  // Predicated region
  $region18: #{one_hot.1} parent=0 // pred_check
    _
  $region19: #{one_hot.1} parent=0 // pred_check_branch
    %367 = sbr.rel (0) target = $region21
  $region20: #{one_hot.1} parent=0 // pred_region
    _
  $region21: #{one_hot.1} parent=0 // pred_fallthru
    _

</llo_original>
